<compile_context>
chip_gen: v7x
topology: tpu7x:2x2x1
jax: 0.10.0
libtpu: 0.0.40
codegen_flags: <defaults>
</compile_context>

<pallas_src>
import math
import jax
import jax.numpy as jnp
from jax.experimental import pallas as pl
from jax.experimental.pallas import tpu as pltpu


def _round_up(x: int, m: int) -> int:
    return (x + m - 1) // m * m


def _cdiv(a: int, b: int) -> int:
    return -(-a // b)


# ----------------------------------------------------------------------------
# Kernel
# ----------------------------------------------------------------------------
def mlp_kernel(x_ref, w1_ref, b1_ref, w2_ref, b2_ref, w3_ref, b3_ref, out_ref):
    x = x_ref[...]                                                    # (tb, Ep)

    # fc1 + Sigmoid (single-transcendental form), cast fused into activation.
    h1 = jnp.dot(x, w1_ref[...], preferred_element_type=jnp.float32)
    h1 = (0.5 * jnp.tanh(0.5 * (h1 + b1_ref[...])) + 0.5).astype(w2_ref.dtype)

    # fc2 + Sigmoid
    h2 = jnp.dot(h1, w2_ref[...], preferred_element_type=jnp.float32)
    h2 = (0.5 * jnp.tanh(0.5 * (h2 + b2_ref[...])) + 0.5).astype(w3_ref.dtype)

    # fc3 + Tanh
    h3 = jnp.dot(h2, w3_ref[...], preferred_element_type=jnp.float32)
    out_ref[...] = jnp.tanh(h3 + b3_ref[...]).astype(out_ref.dtype)


# ----------------------------------------------------------------------------
# One-time parameter preparation (pad to 128 lanes, cast MXU operands)
# ----------------------------------------------------------------------------
def prepare_params(w1, b1, w2, b2, w3, b3, *, use_bf16=True):
    """Pad feature dims to multiples of 128 and cast weights to the MXU dtype.

    Zero-padding is semantics-preserving: padded hidden columns produce
    sigmoid(0)=0.5 but are multiplied by zero weight rows in the next layer;
    padded output columns are sliced away in the wrapper.
    """
    mxu_dtype = jnp.bfloat16 if use_bf16 else jnp.float32
    E, H1 = w1.shape
    H2 = w2.shape[1]
    C = w3.shape[1]
    Ep, H1p, H2p, Cp = (_round_up(d, 128) for d in (E, H1, H2, C))

    def pad2(a, rows, cols, dtype):
        a = jnp.asarray(a).reshape((-1, a.shape[-1]))
        if a.shape == (rows, cols) and a.dtype == dtype:
            return a
        return (jnp.zeros((rows, cols), dtype)
                .at[: a.shape[0], : a.shape[1]].set(a.astype(dtype)))

    return {
        "w1": pad2(w1, Ep, H1p, mxu_dtype),
        "b1": pad2(b1, 1, H1p, jnp.float32),
        "w2": pad2(w2, H1p, H2p, mxu_dtype),
        "b2": pad2(b2, 1, H2p, jnp.float32),
        "w3": pad2(w3, H2p, Cp, mxu_dtype),
        "b3": pad2(b3, 1, Cp, jnp.float32),
        "dims": (E, H1, H2, C),
        "mxu_dtype": mxu_dtype,
    }


# ----------------------------------------------------------------------------
# Forward wrapper
# ----------------------------------------------------------------------------
def _pick_batch_tile(B, gran, block_batch):
    if block_batch is not None:
        return max(_round_up(block_batch, gran), gran)
    if B <= 128:
        return max(_round_up(B, gran), gran)       # tiny batch -> single step
    # >= 2 grid steps so the "parallel" axis can shard across v7x's 2 TCs;
    # tile near B/steps to minimize padded-row MXU work.
    steps = max(2, _cdiv(B, 512))
    return max(_round_up(_cdiv(B, steps), gran), gran)


def mlp_forward(x, prepped, *, block_batch=None):
    """y = tanh(sigmoid(sigmoid(x@w1+b1)@w2+b2)@w3+b3) on pre-padded params."""
    E, H1, H2, C = prepped["dims"]
    w1p, b1p = prepped["w1"], prepped["b1"]
    w2p, b2p = prepped["w2"], prepped["b2"]
    w3p, b3p = prepped["w3"], prepped["b3"]
    mxu_dtype = prepped["mxu_dtype"]

    Ep, H1p = w1p.shape
    H2p = w2p.shape[1]
    Cp = w3p.shape[1]

    B = x.shape[0]
    out_dtype = x.dtype
    mxu_bytes = jnp.dtype(mxu_dtype).itemsize
    out_bytes = jnp.dtype(out_dtype).itemsize

    gran = 16 if mxu_dtype == jnp.bfloat16 else 8   # full sublane packing for bf16
    tb = _pick_batch_tile(B, gran, block_batch)
    Bp = _round_up(B, tb)
    grid = (Bp // tb,)

    # ---- x padding (fast path when already aligned) --------------------------
    if (Bp != B) or (Ep != E) or (x.dtype != mxu_dtype):
        xp = (jnp.zeros((Bp, Ep), mxu_dtype)
              .at[:B, :E].set(x.astype(mxu_dtype)))
    else:
        xp = x

    # ---- VMEM budget ----------------------------------------------------------
    # single-buffered weights + biases, double-buffered x/out tiles, intermediates
    weight_bytes = mxu_bytes * (Ep * H1p + H1p * H2p + H2p * Cp) + 4 * (H1p + H2p + Cp)
    io_bytes = 2 * tb * (Ep * mxu_bytes + Cp * out_bytes)
    inter_bytes = tb * 4 * max(H1p, H2p, Cp) + tb * mxu_bytes * (H1p + H2p)
    vmem_need = weight_bytes + io_bytes + inter_bytes
    try:
        vmem_cap = int(pltpu.get_tpu_info().vmem_capacity_bytes)
    except Exception:
        vmem_cap = 64 * 1024 * 1024                 # v7x physical; safe everywhere
    vmem_limit = int(min(0.85 * vmem_cap,
                         max(8 * 1024 * 1024, 1.3 * vmem_need + (2 << 20))))

    # ---- advisory cost estimate ----------------------------------------------
    cost = pl.CostEstimate(
        flops=2 * B * (E * H1 + H1 * H2 + H2 * C),
        transcendentals=B * (H1 + H2 + C),
        bytes_accessed=int(x.size * x.dtype.itemsize
                           + (w1p.size + w2p.size + w3p.size) * mxu_bytes
                           + (b1p.size + b2p.size + b3p.size) * 4
                           + B * C * out_bytes),
    )

    def build(single_buffer_weights):
        if single_buffer_weights:
            wspec = lambda shape: pl.BlockSpec(shape, lambda i: (0, 0),
                                               pipeline_mode=pl.Buffered(1))
        else:
            wspec = lambda shape: pl.BlockSpec(shape, lambda i: (0, 0))
        return pl.pallas_call(
            mlp_kernel,
            out_shape=jax.ShapeDtypeStruct((Bp, Cp), out_dtype),
            grid_spec=pltpu.PrefetchScalarGridSpec(
                num_scalar_prefetch=0,
                grid=grid,
                in_specs=[
                    pl.BlockSpec((tb, Ep), lambda i: (i, 0)),   # x tile over batch
                    wspec((Ep, H1p)),
                    wspec((1, H1p)),
                    wspec((H1p, H2p)),
                    wspec((1, H2p)),
                    wspec((H2p, Cp)),
                    wspec((1, Cp)),
                ],
                out_specs=pl.BlockSpec((tb, Cp), lambda i: (i, 0)),
            ),
            compiler_params=pltpu.CompilerParams(
                dimension_semantics=("parallel",),
                vmem_limit_bytes=vmem_limit,
            ),
            cost_estimate=cost,
        )

    try:
        out_padded = build(True)(xp, w1p, b1p, w2p, b2p, w3p, b3p)
    except Exception:
        # Fallback: default (double) buffering on grid-invariant operands.
        out_padded = build(False)(xp, w1p, b1p, w2p, b2p, w3p, b3p)

    if (Bp != B) or (Cp != C):
        return out_padded[:B, :C]
    return out_padded


# ----------------------------------------------------------------------------
# Init + reference
# ----------------------------------------------------------------------------
def init_params(key, embedding_dim, hidden1, hidden2, nb_classes):
    """Deterministic init mimicking the module's _reset_params uniform(-stdv, stdv)."""
    def linear(key, fan_in, fan_out):
        kw, kb = jax.random.split(key)
        stdv = 1.0 / math.sqrt(fan_in)
        # stored as (in, out) == transpose of PyTorch's (out, in) layout
        w = jax.random.uniform(kw, (fan_in, fan_out), jnp.float32, -stdv, stdv)
        b = jax.random.uniform(kb, (1, fan_out), jnp.float32, -stdv, stdv)
        return w, b

    k1, k2, k3 = jax.random.split(key, 3)
    w1, b1 = linear(k1, embedding_dim, hidden1)
    w2, b2 = linear(k2, hidden1, hidden2)
    w3, b3 = linear(k3, hidden2, nb_classes)
    return w1, b1, w2, b2, w3, b3


def reference_forward(x, w1, b1, w2, b2, w3, b3):
    h = jax.nn.sigmoid(x @ w1 + b1)
    h = jax.nn.sigmoid(h @ w2 + b2)
    return jnp.tanh(h @ w3 + b3)


if __name__ == "__main__":
    # Small shapes consistent with the module: opt.embedding_size, hidden_size_1,
    # hidden_size_2, nb_classes.
    batch = 8
    embedding_dim = 32
    hidden1 = 64
    hidden2 = 48
    nb_classes = 16

    key = jax.random.PRNGKey(0)
    kx, kp = jax.random.split(key)

    x = jax.random.normal(kx, (batch, embedding_dim), jnp.float32)
    params = init_params(kp, embedding_dim, hidden1, hidden2, nb_classes)

    ref = reference_forward(x, *params)

    # f32 path: exact-ish agreement with the reference.
    prepped_f32 = prepare_params(*params, use_bf16=False)
    out_f32 = jax.block_until_ready(mlp_forward(x, prepped_f32))
    assert out_f32.shape == (batch, nb_classes)
    assert jnp.allclose(out_f32, ref, atol=1e-5, rtol=1e-5)

    # bf16-MXU path (default): f32 accumulation keeps it close to the f32 ref.
    prepped_bf16 = prepare_params(*params, use_bf16=True)
    out_bf16 = jax.block_until_ready(mlp_forward(x, prepped_bf16))
    assert out_bf16.shape == (batch, nb_classes)
    assert jnp.allclose(out_bf16, ref, atol=2e-2, rtol=2e-2)

    print("KERNEL_OK")
</pallas_src>

<mosaic_0001>
module attributes {stable_mosaic.version = 11 : i64} {
  func.func @mlp_kernel(%arg0: i32, %arg1: memref<8x128xf32, #tpu.memory_space<vmem>>, %arg2: memref<128x128xf32, #tpu.memory_space<vmem>>, %arg3: memref<1x128xf32, #tpu.memory_space<vmem>>, %arg4: memref<128x128xf32, #tpu.memory_space<vmem>>, %arg5: memref<1x128xf32, #tpu.memory_space<vmem>>, %arg6: memref<128x128xf32, #tpu.memory_space<vmem>>, %arg7: memref<1x128xf32, #tpu.memory_space<vmem>>, %arg8: memref<8x128xf32, #tpu.memory_space<vmem>>) attributes {dimension_semantics = [#tpu.dimension_semantics<parallel>], iteration_bounds = array<i64: 1>, scalar_prefetch = 0 : i64, scratch_operands = 0 : i64, tpu.core_type = #tpu.core_type<tc>, window_params = [{transform_indices = @transform_0, window_bounds = array<i64: 8, 128>}, {pipeline_mode = #tpu.pipeline_mode<synchronous>, transform_indices = @transform_1, window_bounds = array<i64: 128, 128>}, {pipeline_mode = #tpu.pipeline_mode<synchronous>, transform_indices = @transform_2, window_bounds = array<i64: 1, 128>}, {pipeline_mode = #tpu.pipeline_mode<synchronous>, transform_indices = @transform_3, window_bounds = array<i64: 128, 128>}, {pipeline_mode = #tpu.pipeline_mode<synchronous>, transform_indices = @transform_4, window_bounds = array<i64: 1, 128>}, {pipeline_mode = #tpu.pipeline_mode<synchronous>, transform_indices = @transform_5, window_bounds = array<i64: 128, 128>}, {pipeline_mode = #tpu.pipeline_mode<synchronous>, transform_indices = @transform_6, window_bounds = array<i64: 1, 128>}, {transform_indices = @transform_7, window_bounds = array<i64: 8, 128>}]} {
    %c0 = arith.constant 0 : index
    %c0_0 = arith.constant 0 : index
    %0 = vector.load %arg1[%c0, %c0_0] : memref<8x128xf32, #tpu.memory_space<vmem>>, vector<8x128xf32>
    %c0_1 = arith.constant 0 : index
    %c0_2 = arith.constant 0 : index
    %1 = vector.load %arg2[%c0_1, %c0_2] : memref<128x128xf32, #tpu.memory_space<vmem>>, vector<128x128xf32>
    %cst = arith.constant dense<0.000000e+00> : vector<8x128xf32>
    %2 = tpu.matmul %0, %1, %cst {dimension_numbers = #tpu.dot_dimension_numbers<[1], [0], [0], [1], [0, 0, 1, 1], [], []>} : vector<8x128xf32>, vector<128x128xf32>, vector<8x128xf32> -> vector<8x128xf32>
    %c0_3 = arith.constant 0 : index
    %c0_4 = arith.constant 0 : index
    %3 = vector.load %arg3[%c0_3, %c0_4] : memref<1x128xf32, #tpu.memory_space<vmem>>, vector<1x128xf32>
    %4 = vector.broadcast %3 : vector<1x128xf32> to vector<8x128xf32>
    %5 = arith.addf %2, %4 : vector<8x128xf32>
    %cst_5 = arith.constant 5.000000e-01 : f32
    %6 = vector.broadcast %cst_5 : f32 to vector<8x128xf32>
    %7 = arith.mulf %6, %5 : vector<8x128xf32>
    %8 = math.tanh %7 : vector<8x128xf32>
    %cst_6 = arith.constant 5.000000e-01 : f32
    %9 = vector.broadcast %cst_6 : f32 to vector<8x128xf32>
    %10 = arith.mulf %9, %8 : vector<8x128xf32>
    %cst_7 = arith.constant 5.000000e-01 : f32
    %11 = vector.broadcast %cst_7 : f32 to vector<8x128xf32>
    %12 = arith.addf %10, %11 : vector<8x128xf32>
    %c0_8 = arith.constant 0 : index
    %c0_9 = arith.constant 0 : index
    %13 = vector.load %arg4[%c0_8, %c0_9] : memref<128x128xf32, #tpu.memory_space<vmem>>, vector<128x128xf32>
    %cst_10 = arith.constant dense<0.000000e+00> : vector<8x128xf32>
    %14 = tpu.matmul %12, %13, %cst_10 {dimension_numbers = #tpu.dot_dimension_numbers<[1], [0], [0], [1], [0, 0, 1, 1], [], []>} : vector<8x128xf32>, vector<128x128xf32>, vector<8x128xf32> -> vector<8x128xf32>
    %c0_11 = arith.constant 0 : index
    %c0_12 = arith.constant 0 : index
    %15 = vector.load %arg5[%c0_11, %c0_12] : memref<1x128xf32, #tpu.memory_space<vmem>>, vector<1x128xf32>
    %16 = vector.broadcast %15 : vector<1x128xf32> to vector<8x128xf32>
    %17 = arith.addf %14, %16 : vector<8x128xf32>
    %cst_13 = arith.constant 5.000000e-01 : f32
    %18 = vector.broadcast %cst_13 : f32 to vector<8x128xf32>
    %19 = arith.mulf %18, %17 : vector<8x128xf32>
    %20 = math.tanh %19 : vector<8x128xf32>
    %cst_14 = arith.constant 5.000000e-01 : f32
    %21 = vector.broadcast %cst_14 : f32 to vector<8x128xf32>
    %22 = arith.mulf %21, %20 : vector<8x128xf32>
    %cst_15 = arith.constant 5.000000e-01 : f32
    %23 = vector.broadcast %cst_15 : f32 to vector<8x128xf32>
    %24 = arith.addf %22, %23 : vector<8x128xf32>
    %c0_16 = arith.constant 0 : index
    %c0_17 = arith.constant 0 : index
    %25 = vector.load %arg6[%c0_16, %c0_17] : memref<128x128xf32, #tpu.memory_space<vmem>>, vector<128x128xf32>
    %cst_18 = arith.constant dense<0.000000e+00> : vector<8x128xf32>
    %26 = tpu.matmul %24, %25, %cst_18 {dimension_numbers = #tpu.dot_dimension_numbers<[1], [0], [0], [1], [0, 0, 1, 1], [], []>} : vector<8x128xf32>, vector<128x128xf32>, vector<8x128xf32> -> vector<8x128xf32>
    %c0_19 = arith.constant 0 : index
    %c0_20 = arith.constant 0 : index
    %27 = vector.load %arg7[%c0_19, %c0_20] : memref<1x128xf32, #tpu.memory_space<vmem>>, vector<1x128xf32>
    %28 = vector.broadcast %27 : vector<1x128xf32> to vector<8x128xf32>
    %29 = arith.addf %26, %28 : vector<8x128xf32>
    %30 = math.tanh %29 : vector<8x128xf32>
    %c0_21 = arith.constant 0 : index
    %c0_22 = arith.constant 0 : index
    %31 = vector.load %arg8[%c0_21, %c0_22] : memref<8x128xf32, #tpu.memory_space<vmem>>, vector<8x128xf32>
    tpu.vector_store %arg8[%c0_21, %c0_22], %30 {strides = array<i32>} : memref<8x128xf32, #tpu.memory_space<vmem>>, vector<8x128xf32>,
    return
  }
  func.func @transform_0(%arg0: i32) -> (i32, i32) {
    %c0_i32 = arith.constant 0 : i32
    %c0_i32_0 = arith.constant 0 : i32
    return %arg0, %c0_i32 : i32, i32
  }
  func.func @transform_1(%arg0: i32) -> (i32, i32) {
    %c0_i32 = arith.constant 0 : i32
    %c0_i32_0 = arith.constant 0 : i32
    %c0_i32_1 = arith.constant 0 : i32
    return %c0_i32, %c0_i32_0 : i32, i32
  }
  func.func @transform_2(%arg0: i32) -> (i32, i32) {
    %c0_i32 = arith.constant 0 : i32
    %c0_i32_0 = arith.constant 0 : i32
    %c0_i32_1 = arith.constant 0 : i32
    return %c0_i32, %c0_i32_0 : i32, i32
  }
  func.func @transform_3(%arg0: i32) -> (i32, i32) {
    %c0_i32 = arith.constant 0 : i32
    %c0_i32_0 = arith.constant 0 : i32
    %c0_i32_1 = arith.constant 0 : i32
    return %c0_i32, %c0_i32_0 : i32, i32
  }
  func.func @transform_4(%arg0: i32) -> (i32, i32) {
    %c0_i32 = arith.constant 0 : i32
    %c0_i32_0 = arith.constant 0 : i32
    %c0_i32_1 = arith.constant 0 : i32
    return %c0_i32, %c0_i32_0 : i32, i32
  }
  func.func @transform_5(%arg0: i32) -> (i32, i32) {
    %c0_i32 = arith.constant 0 : i32
    %c0_i32_0 = arith.constant 0 : i32
    %c0_i32_1 = arith.constant 0 : i32
    return %c0_i32, %c0_i32_0 : i32, i32
  }
  func.func @transform_6(%arg0: i32) -> (i32, i32) {
    %c0_i32 = arith.constant 0 : i32
    %c0_i32_0 = arith.constant 0 : i32
    %c0_i32_1 = arith.constant 0 : i32
    return %c0_i32, %c0_i32_0 : i32, i32
  }
  func.func @transform_7(%arg0: i32) -> (i32, i32) {
    %c0_i32 = arith.constant 0 : i32
    %c0_i32_0 = arith.constant 0 : i32
    return %arg0, %c0_i32 : i32, i32
  }
}

module attributes {stable_mosaic.version = 11 : i64} {
  func.func @mlp_kernel(%arg0: i32, %arg1: memref<8x128xf32, #tpu.memory_space<vmem>>, %arg2: memref<128x128xf32, #tpu.memory_space<vmem>>, %arg3: memref<1x128xf32, #tpu.memory_space<vmem>>, %arg4: memref<128x128xf32, #tpu.memory_space<vmem>>, %arg5: memref<1x128xf32, #tpu.memory_space<vmem>>, %arg6: memref<128x128xf32, #tpu.memory_space<vmem>>, %arg7: memref<1x128xf32, #tpu.memory_space<vmem>>, %arg8: memref<8x128xf32, #tpu.memory_space<vmem>>) attributes {dimension_semantics = [#tpu.dimension_semantics<parallel>], iteration_bounds = array<i64: 1>, scalar_prefetch = 0 : i64, scratch_operands = 0 : i64, tpu.core_type = #tpu.core_type<tc>, window_params = [{transform_indices = @transform_0, window_bounds = array<i64: 8, 128>}, {pipeline_mode = #tpu.pipeline_mode<synchronous>, transform_indices = @transform_1, window_bounds = array<i64: 128, 128>}, {pipeline_mode = #tpu.pipeline_mode<synchronous>, transform_indices = @transform_2, window_bounds = array<i64: 1, 128>}, {pipeline_mode = #tpu.pipeline_mode<synchronous>, transform_indices = @transform_3, window_bounds = array<i64: 128, 128>}, {pipeline_mode = #tpu.pipeline_mode<synchronous>, transform_indices = @transform_4, window_bounds = array<i64: 1, 128>}, {pipeline_mode = #tpu.pipeline_mode<synchronous>, transform_indices = @transform_5, window_bounds = array<i64: 128, 128>}, {pipeline_mode = #tpu.pipeline_mode<synchronous>, transform_indices = @transform_6, window_bounds = array<i64: 1, 128>}, {transform_indices = @transform_7, window_bounds = array<i64: 8, 128>}]} {
    %c0 = arith.constant 0 : index
    %c0_0 = arith.constant 0 : index
    %0 = vector.load %arg1[%c0, %c0_0] : memref<8x128xf32, #tpu.memory_space<vmem>>, vector<8x128xf32>
    %c0_1 = arith.constant 0 : index
    %c0_2 = arith.constant 0 : index
    %1 = vector.load %arg2[%c0_1, %c0_2] : memref<128x128xf32, #tpu.memory_space<vmem>>, vector<128x128xf32>
    %cst = arith.constant dense<0.000000e+00> : vector<8x128xf32>
    %2 = tpu.matmul %0, %1, %cst {dimension_numbers = #tpu.dot_dimension_numbers<[1], [0], [0], [1], [0, 0, 1, 1], [], []>} : vector<8x128xf32>, vector<128x128xf32>, vector<8x128xf32> -> vector<8x128xf32>
    %c0_3 = arith.constant 0 : index
    %c0_4 = arith.constant 0 : index
    %3 = vector.load %arg3[%c0_3, %c0_4] : memref<1x128xf32, #tpu.memory_space<vmem>>, vector<1x128xf32>
    %4 = vector.broadcast %3 : vector<1x128xf32> to vector<8x128xf32>
    %5 = arith.addf %2, %4 : vector<8x128xf32>
    %cst_5 = arith.constant 5.000000e-01 : f32
    %6 = vector.broadcast %cst_5 : f32 to vector<8x128xf32>
    %7 = arith.mulf %6, %5 : vector<8x128xf32>
    %8 = math.tanh %7 : vector<8x128xf32>
    %cst_6 = arith.constant 5.000000e-01 : f32
    %9 = vector.broadcast %cst_6 : f32 to vector<8x128xf32>
    %10 = arith.mulf %9, %8 : vector<8x128xf32>
    %cst_7 = arith.constant 5.000000e-01 : f32
    %11 = vector.broadcast %cst_7 : f32 to vector<8x128xf32>
    %12 = arith.addf %10, %11 : vector<8x128xf32>
    %c0_8 = arith.constant 0 : index
    %c0_9 = arith.constant 0 : index
    %13 = vector.load %arg4[%c0_8, %c0_9] : memref<128x128xf32, #tpu.memory_space<vmem>>, vector<128x128xf32>
    %cst_10 = arith.constant dense<0.000000e+00> : vector<8x128xf32>
    %14 = tpu.matmul %12, %13, %cst_10 {dimension_numbers = #tpu.dot_dimension_numbers<[1], [0], [0], [1], [0, 0, 1, 1], [], []>} : vector<8x128xf32>, vector<128x128xf32>, vector<8x128xf32> -> vector<8x128xf32>
    %c0_11 = arith.constant 0 : index
    %c0_12 = arith.constant 0 : index
    %15 = vector.load %arg5[%c0_11, %c0_12] : memref<1x128xf32, #tpu.memory_space<vmem>>, vector<1x128xf32>
    %16 = vector.broadcast %15 : vector<1x128xf32> to vector<8x128xf32>
    %17 = arith.addf %14, %16 : vector<8x128xf32>
    %cst_13 = arith.constant 5.000000e-01 : f32
    %18 = vector.broadcast %cst_13 : f32 to vector<8x128xf32>
    %19 = arith.mulf %18, %17 : vector<8x128xf32>
    %20 = math.tanh %19 : vector<8x128xf32>
    %cst_14 = arith.constant 5.000000e-01 : f32
    %21 = vector.broadcast %cst_14 : f32 to vector<8x128xf32>
    %22 = arith.mulf %21, %20 : vector<8x128xf32>
    %cst_15 = arith.constant 5.000000e-01 : f32
    %23 = vector.broadcast %cst_15 : f32 to vector<8x128xf32>
    %24 = arith.addf %22, %23 : vector<8x128xf32>
    %c0_16 = arith.constant 0 : index
    %c0_17 = arith.constant 0 : index
    %25 = vector.load %arg6[%c0_16, %c0_17] : memref<128x128xf32, #tpu.memory_space<vmem>>, vector<128x128xf32>
    %cst_18 = arith.constant dense<0.000000e+00> : vector<8x128xf32>
    %26 = tpu.matmul %24, %25, %cst_18 {dimension_numbers = #tpu.dot_dimension_numbers<[1], [0], [0], [1], [0, 0, 1, 1], [], []>} : vector<8x128xf32>, vector<128x128xf32>, vector<8x128xf32> -> vector<8x128xf32>
    %c0_19 = arith.constant 0 : index
    %c0_20 = arith.constant 0 : index
    %27 = vector.load %arg7[%c0_19, %c0_20] : memref<1x128xf32, #tpu.memory_space<vmem>>, vector<1x128xf32>
    %28 = vector.broadcast %27 : vector<1x128xf32> to vector<8x128xf32>
    %29 = arith.addf %26, %28 : vector<8x128xf32>
    %30 = math.tanh %29 : vector<8x128xf32>
    %c0_21 = arith.constant 0 : index
    %c0_22 = arith.constant 0 : index
    %31 = vector.load %arg8[%c0_21, %c0_22] : memref<8x128xf32, #tpu.memory_space<vmem>>, vector<8x128xf32>
    tpu.vector_store %arg8[%c0_21, %c0_22], %30 {strides = array<i32>} : memref<8x128xf32, #tpu.memory_space<vmem>>, vector<8x128xf32>,
    return
  }
  func.func @transform_0(%arg0: i32) -> (i32, i32) {
    %c0_i32 = arith.constant 0 : i32
    %c0_i32_0 = arith.constant 0 : i32
    return %arg0, %c0_i32 : i32, i32
  }
  func.func @transform_1(%arg0: i32) -> (i32, i32) {
    %c0_i32 = arith.constant 0 : i32
    %c0_i32_0 = arith.constant 0 : i32
    %c0_i32_1 = arith.constant 0 : i32
    return %c0_i32, %c0_i32_0 : i32, i32
  }
  func.func @transform_2(%arg0: i32) -> (i32, i32) {
    %c0_i32 = arith.constant 0 : i32
    %c0_i32_0 = arith.constant 0 : i32
    %c0_i32_1 = arith.constant 0 : i32
    return %c0_i32, %c0_i32_0 : i32, i32
  }
  func.func @transform_3(%arg0: i32) -> (i32, i32) {
    %c0_i32 = arith.constant 0 : i32
    %c0_i32_0 = arith.constant 0 : i32
    %c0_i32_1 = arith.constant 0 : i32
    return %c0_i32, %c0_i32_0 : i32, i32
  }
  func.func @transform_4(%arg0: i32) -> (i32, i32) {
    %c0_i32 = arith.constant 0 : i32
    %c0_i32_0 = arith.constant 0 : i32
    %c0_i32_1 = arith.constant 0 : i32
    return %c0_i32, %c0_i32_0 : i32, i32
  }
  func.func @transform_5(%arg0: i32) -> (i32, i32) {
    %c0_i32 = arith.constant 0 : i32
    %c0_i32_0 = arith.constant 0 : i32
    %c0_i32_1 = arith.constant 0 : i32
    return %c0_i32, %c0_i32_0 : i32, i32
  }
  func.func @transform_6(%arg0: i32) -> (i32, i32) {
    %c0_i32 = arith.constant 0 : i32
    %c0_i32_0 = arith.constant 0 : i32
    %c0_i32_1 = arith.constant 0 : i32
    return %c0_i32, %c0_i32_0 : i32, i32
  }
  func.func @transform_7(%arg0: i32) -> (i32, i32) {
    %c0_i32 = arith.constant 0 : i32
    %c0_i32_0 = arith.constant 0 : i32
    return %arg0, %c0_i32 : i32, i32
  }
}

</mosaic_0001>

<llo_original>
// kernel: tpu_custom_call.1
$region0: #{tpu_custom_call.1}
  #allocation0 [shape = 'u32[]', space=smem, size = 0x4, offset = 0x4, fixed_abs, tag = 'smem constant byte address 0x4 - core index']
  #allocation1 [shape = 'u32[144,128]{1,0:T(1,128)}', space=vmem, size = 0x12000, scoped, tag = 'internal scratch']
  %s0 = inlined_call_operand.hbm [shape: f32[8,128], index: 0, kind: input, shape index: {}]
  %s1 = inlined_call_operand.hbm [shape: f32[128,128], index: 1, kind: input, shape index: {}]
  %s2 = inlined_call_operand.vmem [shape: f32[1,128], index: 2, kind: input, shape index: {}]
  %s3 = inlined_call_operand.hbm [shape: f32[128,128], index: 3, kind: input, shape index: {}]
  %s4 = inlined_call_operand.vmem [shape: f32[1,128], index: 4, kind: input, shape index: {}]
  %s5 = inlined_call_operand.hbm [shape: f32[128,128], index: 5, kind: input, shape index: {}]
  %s6 = inlined_call_operand.vmem [shape: f32[1,128], index: 6, kind: input, shape index: {}]
  %s7 = inlined_call_operand.hbm [shape: f32[8,128], index: 7, kind: output, shape index: {}]
  %s8 = sld [smem:[#allocation0]]
  $region54: #{tpu_custom_call.1} parent=0
    _
  %s10 = ssub.s32 1, %s8
  %s11 = scalar_select 0, %s10, %s8
  $region1: #{tpu_custom_call.1} parent=0
    #allocation2 [shape = 'u8[4096]{0}', space=vmem, size = 0x1000, scoped, tag = 'input window, operand 0, single buffered']
    #allocation3 [shape = 's32[1]{0}', space=sflag, size = 0x4, scoped, tag = 'scoped memory for tpu_custom_call.1']
    #allocation4 [shape = 's32[1]{0}', space=sflag, size = 0x4, scoped, tag = 'scoped memory for tpu_custom_call.1']
    #allocation5 [shape = 'u8[65536]{0}', space=vmem, size = 0x10000, scoped, tag = 'input window, operand 1, single buffered']
    #allocation6 [shape = 's32[1]{0}', space=sflag, size = 0x4, scoped, tag = 'scoped memory for tpu_custom_call.1']
    #allocation7 [shape = 'u8[65536]{0}', space=vmem, size = 0x10000, scoped, tag = 'input window, operand 3, single buffered']
    #allocation8 [shape = 'u8[65536]{0}', space=vmem, size = 0x10000, scoped, tag = 'input window, operand 5, single buffered']
    #allocation9 [shape = 's32[1]{0}', space=sflag, size = 0x4, scoped, tag = 'scoped memory for tpu_custom_call.1']
    #allocation10 [shape = 'u8[4096]{0}', space=vmem, size = 0x1000, scoped, tag = 'output window, operand 0, single buffered']
    %12 = vsyncpa [#allocation3], 0
    %13 = vsyncpa [#allocation6], 0
    %14 = vsyncpa [#allocation9], 0
    %15 = vsyncpa [#allocation4], 0
    // Predicated region
    $region2: #{tpu_custom_call.1} parent=1 // pred_check
      _
    $region3: #{tpu_custom_call.1} parent=1 // pred_check_branch
      %17 = sbr.rel (0) target = $region5
    $region4: #{tpu_custom_call.1} parent=1 // pred_region
      %s19 = ssub.s32 128, 128
      %20 = vsyncadd [#allocation3], %s19
      %s22 = sshll.u32 [#allocation2], 4
      %s23 = int_to_ptr.vmem [resolvable:$true] %s22
      %25 = dma.hbm_to_vmem [thread:$0]  %s0, 128, %s23, [#allocation3]
    $region5: #{tpu_custom_call.1} parent=1 // pred_fallthru
      _
    // Predicated region
    $region6: #{tpu_custom_call.1} parent=1 // pred_check
      _
    $region7: #{tpu_custom_call.1} parent=1 // pred_check_branch
      %27 = sbr.rel (0) target = $region9
    $region8: #{tpu_custom_call.1} parent=1 // pred_region
      %s29 = ssub.s32 2048, 2048
      %30 = vsyncadd [#allocation6], %s29
      %s31 = sshll.u32 [#allocation5], 4
      %s32 = int_to_ptr.vmem [resolvable:$true] %s31
      %37 = dma.hbm_to_vmem [thread:$0]  %s1, 2048, %s32, [#allocation6], 128, 128, 8
    $region9: #{tpu_custom_call.1} parent=1 // pred_fallthru
      _
    // Predicated region
    $region10: #{tpu_custom_call.1} parent=1 // pred_check
      _
    $region11: #{tpu_custom_call.1} parent=1 // pred_check_branch
      %39 = sbr.rel (0) target = $region13
    $region12: #{tpu_custom_call.1} parent=1 // pred_region
      _
    $region13: #{tpu_custom_call.1} parent=1 // pred_fallthru
      _
    // Predicated region
    $region14: #{tpu_custom_call.1} parent=1 // pred_check
      _
    $region15: #{tpu_custom_call.1} parent=1 // pred_check_branch
      %41 = sbr.rel (0) target = $region17
    $region16: #{tpu_custom_call.1} parent=1 // pred_region
      %s43 = ssub.s32 2048, 2048
      %44 = vsyncadd [#allocation6], %s43
      %s45 = sshll.u32 [#allocation7], 4
      %s46 = int_to_ptr.vmem [resolvable:$true] %s45
      %51 = dma.hbm_to_vmem [thread:$0]  %s3, 2048, %s46, [#allocation6], 128, 128, 8
    $region17: #{tpu_custom_call.1} parent=1 // pred_fallthru
      _
    // Predicated region
    $region18: #{tpu_custom_call.1} parent=1 // pred_check
      _
    $region19: #{tpu_custom_call.1} parent=1 // pred_check_branch
      %53 = sbr.rel (0) target = $region21
    $region20: #{tpu_custom_call.1} parent=1 // pred_region
      _
    $region21: #{tpu_custom_call.1} parent=1 // pred_fallthru
      _
    // Predicated region
    $region22: #{tpu_custom_call.1} parent=1 // pred_check
      _
    $region23: #{tpu_custom_call.1} parent=1 // pred_check_branch
      %55 = sbr.rel (0) target = $region25
    $region24: #{tpu_custom_call.1} parent=1 // pred_region
      %s57 = ssub.s32 2048, 2048
      %58 = vsyncadd [#allocation9], %s57
      %s59 = sshll.u32 [#allocation8], 4
      %s60 = int_to_ptr.vmem [resolvable:$true] %s59
      %65 = dma.hbm_to_vmem [thread:$0]  %s5, 2048, %s60, [#allocation9], 128, 128, 8
    $region25: #{tpu_custom_call.1} parent=1 // pred_fallthru
      _
    // Predicated region
    $region26: #{tpu_custom_call.1} parent=1 // pred_check
      _
    $region27: #{tpu_custom_call.1} parent=1 // pred_check_branch
      %67 = sbr.rel (0) target = $region29
    $region28: #{tpu_custom_call.1} parent=1 // pred_region
      _
    $region29: #{tpu_custom_call.1} parent=1 // pred_fallthru
      _
    // Predicated region
    $region30: #{tpu_custom_call.1} parent=1 // pred_check
      _
    $region31: #{tpu_custom_call.1} parent=1 // pred_check_branch
      %69 = sbr.rel (0) target = $region33
    $region32: #{tpu_custom_call.1} parent=1 // pred_region
      %70 = dma.done [#allocation3], 128
    $region33: #{tpu_custom_call.1} parent=1 // pred_fallthru
      _
    // Predicated region
    $region34: #{tpu_custom_call.1} parent=1 // pred_check
      _
    $region35: #{tpu_custom_call.1} parent=1 // pred_check_branch
      %72 = sbr.rel (0) target = $region37
    $region36: #{tpu_custom_call.1} parent=1 // pred_region
      %73 = dma.done [#allocation6], 2048
    $region37: #{tpu_custom_call.1} parent=1 // pred_fallthru
      _
    // Predicated region
    $region38: #{tpu_custom_call.1} parent=1 // pred_check
      _
    $region39: #{tpu_custom_call.1} parent=1 // pred_check_branch
      %75 = sbr.rel (0) target = $region41
    $region40: #{tpu_custom_call.1} parent=1 // pred_region
      %76 = dma.done [#allocation6], 2048
    $region41: #{tpu_custom_call.1} parent=1 // pred_fallthru
      _
    // Predicated region
    $region42: #{tpu_custom_call.1} parent=1 // pred_check
      _
    $region43: #{tpu_custom_call.1} parent=1 // pred_check_branch
      %78 = sbr.rel (0) target = $region45
    $region44: #{tpu_custom_call.1} parent=1 // pred_region
      %79 = dma.done [#allocation9], 2048
    $region45: #{tpu_custom_call.1} parent=1 // pred_fallthru
      _
    %v80 = vld [vmem:[#allocation2] sm:$0xff]
    %v81 = vld [vmem:[#allocation5] sm:$0xff]
    %v82 = vld [vmem:[#allocation5 + $0x8] sm:$0xff]
    %v83 = vld [vmem:[#allocation5 + $0x10] sm:$0xff]
    %v84 = vld [vmem:[#allocation5 + $0x18] sm:$0xff]
    %v85 = vld [vmem:[#allocation5 + $0x20] sm:$0xff]
    %v86 = vld [vmem:[#allocation5 + $0x28] sm:$0xff]
    %v87 = vld [vmem:[#allocation5 + $0x30] sm:$0xff]
    %v88 = vld [vmem:[#allocation5 + $0x38] sm:$0xff]
    %v89 = vld [vmem:[#allocation5 + $0x40] sm:$0xff]
    %v90 = vld [vmem:[#allocation5 + $0x48] sm:$0xff]
    %v91 = vld [vmem:[#allocation5 + $0x50] sm:$0xff]
    %v92 = vld [vmem:[#allocation5 + $0x58] sm:$0xff]
    %v93 = vld [vmem:[#allocation5 + $0x60] sm:$0xff]
    %v94 = vld [vmem:[#allocation5 + $0x68] sm:$0xff]
    %v95 = vld [vmem:[#allocation5 + $0x70] sm:$0xff]
    %v96 = vld [vmem:[#allocation5 + $0x78] sm:$0xff]
    %v97 = vld [vmem:[%s2] sm:$0x1]
    %v99 = vlaneseq
    %v100 = vshrl.u32 %v99, 7
    %v101 = vsub.s32 0, %v100
    %v102 = vrot.slane %v97, %v101
    %104 = vmatprep.subr.mxu0 0.0
    %105 = vmatpush1.msra.mxu0 %v81
    %106 = vmatprep.subr.mxu0 0.0
    %107 = vmatpush1.msra.mxu0 %v82
    %108 = vmatprep.subr.mxu0 0.0
    %109 = vmatpush1.msra.mxu0 %v83
    %110 = vmatprep.subr.mxu0 0.0
    %111 = vmatpush1.msra.mxu0 %v84
    %112 = vmatprep.subr.mxu0 0.0
    %113 = vmatpush1.msra.mxu0 %v85
    %114 = vmatprep.subr.mxu0 0.0
    %115 = vmatpush1.msra.mxu0 %v86
    %116 = vmatprep.subr.mxu0 0.0
    %117 = vmatpush1.msra.mxu0 %v87
    %118 = vmatprep.subr.mxu0 0.0
    %119 = vmatpush1.msra.mxu0 %v88
    %120 = vmatprep.subr.mxu0 0.0
    %121 = vmatpush1.msra.mxu0 %v89
    %122 = vmatprep.subr.mxu0 0.0
    %123 = vmatpush1.msra.mxu0 %v90
    %124 = vmatprep.subr.mxu0 0.0
    %125 = vmatpush1.msra.mxu0 %v91
    %126 = vmatprep.subr.mxu0 0.0
    %127 = vmatpush1.msra.mxu0 %v92
    %128 = vmatprep.subr.mxu0 0.0
    %129 = vmatpush1.msra.mxu0 %v93
    %130 = vmatprep.subr.mxu0 0.0
    %131 = vmatpush1.msra.mxu0 %v94
    %132 = vmatprep.subr.mxu0 0.0
    %133 = vmatpush1.msra.mxu0 %v95
    %134 = vmatprep.subr.mxu0 0.0
    %135 = vmatpush1.msra.mxu0 %v96
    %136 = vmatprep.subr.mxu0 0.0
    %137 = vmatpush1.msra.mxu0 0.0
    %138 = vmatprep.subr.mxu0 0.0
    %139 = vmatpush1.msra.mxu0 0.0
    %140 = vmatprep.subr.mxu0 0.0
    %141 = vmatpush1.msra.mxu0 0.0
    %142 = vmatprep.subr.mxu0 0.0
    %143 = vmatpush1.msra.mxu0 0.0
    %144 = vmatprep.subr.mxu0 0.0
    %145 = vmatpush1.msra.mxu0 0.0
    %146 = vmatprep.subr.mxu0 0.0
    %147 = vmatpush1.msra.mxu0 0.0
    %148 = vmatprep.subr.mxu0 0.0
    %149 = vmatpush1.msra.mxu0 0.0
    %150 = vmatprep.subr.mxu0 0.0
    %151 = vmatpush1.msra.mxu0 0.0
    %152 = vmatprep.subr.mxu0 0.0
    %153 = vmatpush1.msra.mxu0 0.0
    %154 = vmatprep.subr.mxu0 0.0
    %155 = vmatpush1.msra.mxu0 0.0
    %156 = vmatprep.subr.mxu0 0.0
    %157 = vmatpush1.msra.mxu0 0.0
    %158 = vmatprep.subr.mxu0 0.0
    %159 = vmatpush1.msra.mxu0 0.0
    %160 = vmatprep.subr.mxu0 0.0
    %161 = vmatpush1.msra.mxu0 0.0
    %162 = vmatprep.subr.mxu0 0.0
    %163 = vmatpush1.msra.mxu0 0.0
    %164 = vmatprep.subr.mxu0 0.0
    %165 = vmatpush1.msra.mxu0 0.0
    %166 = vmatprep.subr.mxu0 0.0
    %167 = vmatpush1.msra.mxu0 0.0
    %168 = vmatprep.mubr.f32.mxu0 0.0
    %169 = vmatmul.mubr.f32.gmra.mrb[0].mxu0 %v80
    %v170 = vpop.f32.mrb[0].mxu0
    %v171 = vadd.f32 %v102, %v170
    %v172 = vpop.f32.mrb[0].mxu0
    %173 = vdwg.mxu0
    %v174 = vmul.f32 %v171, 0.5
    %v175 = vtanh.pop %v174
    %v176 = vmul.f32 %v175, 0.5
    %v177 = vadd.f32 %v176, 0.5
    %v178 = vld [vmem:[#allocation7] sm:$0xff]
    %v179 = vld [vmem:[#allocation7 + $0x8] sm:$0xff]
    %v180 = vld [vmem:[#allocation7 + $0x10] sm:$0xff]
    %v181 = vld [vmem:[#allocation7 + $0x18] sm:$0xff]
    %v182 = vld [vmem:[#allocation7 + $0x20] sm:$0xff]
    %v183 = vld [vmem:[#allocation7 + $0x28] sm:$0xff]
    %v184 = vld [vmem:[#allocation7 + $0x30] sm:$0xff]
    %v185 = vld [vmem:[#allocation7 + $0x38] sm:$0xff]
    %v186 = vld [vmem:[#allocation7 + $0x40] sm:$0xff]
    %v187 = vld [vmem:[#allocation7 + $0x48] sm:$0xff]
    %v188 = vld [vmem:[#allocation7 + $0x50] sm:$0xff]
    %v189 = vld [vmem:[#allocation7 + $0x58] sm:$0xff]
    %v190 = vld [vmem:[#allocation7 + $0x60] sm:$0xff]
    %v191 = vld [vmem:[#allocation7 + $0x68] sm:$0xff]
    %v192 = vld [vmem:[#allocation7 + $0x70] sm:$0xff]
    %v193 = vld [vmem:[#allocation7 + $0x78] sm:$0xff]
    %v194 = vld [vmem:[%s4] sm:$0x1]
    %v196 = vlaneseq
    %v197 = vshrl.u32 %v196, 7
    %v198 = vsub.s32 0, %v197
    %v199 = vrot.slane %v194, %v198
    %201 = vmatprep.subr.mxu0 0.0
    %202 = vmatpush1.msra.mxu0 %v178
    %203 = vmatprep.subr.mxu0 0.0
    %204 = vmatpush1.msra.mxu0 %v179
    %205 = vmatprep.subr.mxu0 0.0
    %206 = vmatpush1.msra.mxu0 %v180
    %207 = vmatprep.subr.mxu0 0.0
    %208 = vmatpush1.msra.mxu0 %v181
    %209 = vmatprep.subr.mxu0 0.0
    %210 = vmatpush1.msra.mxu0 %v182
    %211 = vmatprep.subr.mxu0 0.0
    %212 = vmatpush1.msra.mxu0 %v183
    %213 = vmatprep.subr.mxu0 0.0
    %214 = vmatpush1.msra.mxu0 %v184
    %215 = vmatprep.subr.mxu0 0.0
    %216 = vmatpush1.msra.mxu0 %v185
    %217 = vmatprep.subr.mxu0 0.0
    %218 = vmatpush1.msra.mxu0 %v186
    %219 = vmatprep.subr.mxu0 0.0
    %220 = vmatpush1.msra.mxu0 %v187
    %221 = vmatprep.subr.mxu0 0.0
    %222 = vmatpush1.msra.mxu0 %v188
    %223 = vmatprep.subr.mxu0 0.0
    %224 = vmatpush1.msra.mxu0 %v189
    %225 = vmatprep.subr.mxu0 0.0
    %226 = vmatpush1.msra.mxu0 %v190
    %227 = vmatprep.subr.mxu0 0.0
    %228 = vmatpush1.msra.mxu0 %v191
    %229 = vmatprep.subr.mxu0 0.0
    %230 = vmatpush1.msra.mxu0 %v192
    %231 = vmatprep.subr.mxu0 0.0
    %232 = vmatpush1.msra.mxu0 %v193
    %233 = vmatprep.subr.mxu0 0.0
    %234 = vmatpush1.msra.mxu0 0.0
    %235 = vmatprep.subr.mxu0 0.0
    %236 = vmatpush1.msra.mxu0 0.0
    %237 = vmatprep.subr.mxu0 0.0
    %238 = vmatpush1.msra.mxu0 0.0
    %239 = vmatprep.subr.mxu0 0.0
    %240 = vmatpush1.msra.mxu0 0.0
    %241 = vmatprep.subr.mxu0 0.0
    %242 = vmatpush1.msra.mxu0 0.0
    %243 = vmatprep.subr.mxu0 0.0
    %244 = vmatpush1.msra.mxu0 0.0
    %245 = vmatprep.subr.mxu0 0.0
    %246 = vmatpush1.msra.mxu0 0.0
    %247 = vmatprep.subr.mxu0 0.0
    %248 = vmatpush1.msra.mxu0 0.0
    %249 = vmatprep.subr.mxu0 0.0
    %250 = vmatpush1.msra.mxu0 0.0
    %251 = vmatprep.subr.mxu0 0.0
    %252 = vmatpush1.msra.mxu0 0.0
    %253 = vmatprep.subr.mxu0 0.0
    %254 = vmatpush1.msra.mxu0 0.0
    %255 = vmatprep.subr.mxu0 0.0
    %256 = vmatpush1.msra.mxu0 0.0
    %257 = vmatprep.subr.mxu0 0.0
    %258 = vmatpush1.msra.mxu0 0.0
    %259 = vmatprep.subr.mxu0 0.0
    %260 = vmatpush1.msra.mxu0 0.0
    %261 = vmatprep.subr.mxu0 0.0
    %262 = vmatpush1.msra.mxu0 0.0
    %263 = vmatprep.subr.mxu0 0.0
    %264 = vmatpush1.msra.mxu0 0.0
    %265 = vmatprep.mubr.f32.mxu0 0.0
    %266 = vmatmul.mubr.f32.gmra.mrb[0].mxu0 %v177
    %v267 = vpop.f32.mrb[0].mxu0
    %v268 = vadd.f32 %v199, %v267
    %v269 = vpop.f32.mrb[0].mxu0
    %270 = vdwg.mxu0
    %v271 = vmul.f32 %v268, 0.5
    %v272 = vtanh.pop %v271
    %v273 = vmul.f32 %v272, 0.5
    %v274 = vadd.f32 %v273, 0.5
    %v275 = vld [vmem:[#allocation8] sm:$0xff]
    %v276 = vld [vmem:[#allocation8 + $0x8] sm:$0xff]
    %v277 = vld [vmem:[#allocation8 + $0x10] sm:$0xff]
    %v278 = vld [vmem:[#allocation8 + $0x18] sm:$0xff]
    %v279 = vld [vmem:[#allocation8 + $0x20] sm:$0xff]
    %v280 = vld [vmem:[#allocation8 + $0x28] sm:$0xff]
    %v281 = vld [vmem:[#allocation8 + $0x30] sm:$0xff]
    %v282 = vld [vmem:[#allocation8 + $0x38] sm:$0xff]
    %v283 = vld [vmem:[#allocation8 + $0x40] sm:$0xff]
    %v284 = vld [vmem:[#allocation8 + $0x48] sm:$0xff]
    %v285 = vld [vmem:[#allocation8 + $0x50] sm:$0xff]
    %v286 = vld [vmem:[#allocation8 + $0x58] sm:$0xff]
    %v287 = vld [vmem:[#allocation8 + $0x60] sm:$0xff]
    %v288 = vld [vmem:[#allocation8 + $0x68] sm:$0xff]
    %v289 = vld [vmem:[#allocation8 + $0x70] sm:$0xff]
    %v290 = vld [vmem:[#allocation8 + $0x78] sm:$0xff]
    %v291 = vld [vmem:[%s6] sm:$0x1]
    %v293 = vlaneseq
    %v294 = vshrl.u32 %v293, 7
    %v295 = vsub.s32 0, %v294
    %v296 = vrot.slane %v291, %v295
    %298 = vmatprep.subr.mxu0 0.0
    %299 = vmatpush1.msra.mxu0 %v275
    %300 = vmatprep.subr.mxu0 0.0
    %301 = vmatpush1.msra.mxu0 %v276
    %302 = vmatprep.subr.mxu0 0.0
    %303 = vmatpush1.msra.mxu0 %v277
    %304 = vmatprep.subr.mxu0 0.0
    %305 = vmatpush1.msra.mxu0 %v278
    %306 = vmatprep.subr.mxu0 0.0
    %307 = vmatpush1.msra.mxu0 %v279
    %308 = vmatprep.subr.mxu0 0.0
    %309 = vmatpush1.msra.mxu0 %v280
    %310 = vmatprep.subr.mxu0 0.0
    %311 = vmatpush1.msra.mxu0 %v281
    %312 = vmatprep.subr.mxu0 0.0
    %313 = vmatpush1.msra.mxu0 %v282
    %314 = vmatprep.subr.mxu0 0.0
    %315 = vmatpush1.msra.mxu0 %v283
    %316 = vmatprep.subr.mxu0 0.0
    %317 = vmatpush1.msra.mxu0 %v284
    %318 = vmatprep.subr.mxu0 0.0
    %319 = vmatpush1.msra.mxu0 %v285
    %320 = vmatprep.subr.mxu0 0.0
    %321 = vmatpush1.msra.mxu0 %v286
    %322 = vmatprep.subr.mxu0 0.0
    %323 = vmatpush1.msra.mxu0 %v287
    %324 = vmatprep.subr.mxu0 0.0
    %325 = vmatpush1.msra.mxu0 %v288
    %326 = vmatprep.subr.mxu0 0.0
    %327 = vmatpush1.msra.mxu0 %v289
    %328 = vmatprep.subr.mxu0 0.0
    %329 = vmatpush1.msra.mxu0 %v290
    %330 = vmatprep.subr.mxu0 0.0
    %331 = vmatpush1.msra.mxu0 0.0
    %332 = vmatprep.subr.mxu0 0.0
    %333 = vmatpush1.msra.mxu0 0.0
    %334 = vmatprep.subr.mxu0 0.0
    %335 = vmatpush1.msra.mxu0 0.0
    %336 = vmatprep.subr.mxu0 0.0
    %337 = vmatpush1.msra.mxu0 0.0
    %338 = vmatprep.subr.mxu0 0.0
    %339 = vmatpush1.msra.mxu0 0.0
    %340 = vmatprep.subr.mxu0 0.0
    %341 = vmatpush1.msra.mxu0 0.0
    %342 = vmatprep.subr.mxu0 0.0
    %343 = vmatpush1.msra.mxu0 0.0
    %344 = vmatprep.subr.mxu0 0.0
    %345 = vmatpush1.msra.mxu0 0.0
    %346 = vmatprep.subr.mxu0 0.0
    %347 = vmatpush1.msra.mxu0 0.0
    %348 = vmatprep.subr.mxu0 0.0
    %349 = vmatpush1.msra.mxu0 0.0
    %350 = vmatprep.subr.mxu0 0.0
    %351 = vmatpush1.msra.mxu0 0.0
    %352 = vmatprep.subr.mxu0 0.0
    %353 = vmatpush1.msra.mxu0 0.0
    %354 = vmatprep.subr.mxu0 0.0
    %355 = vmatpush1.msra.mxu0 0.0
    %356 = vmatprep.subr.mxu0 0.0
    %357 = vmatpush1.msra.mxu0 0.0
    %358 = vmatprep.subr.mxu0 0.0
    %359 = vmatpush1.msra.mxu0 0.0
    %360 = vmatprep.subr.mxu0 0.0
    %361 = vmatpush1.msra.mxu0 0.0
    %362 = vmatprep.mubr.f32.mxu0 0.0
    %363 = vmatmul.mubr.f32.gmra.mrb[0].mxu0 %v274
    %v364 = vpop.f32.mrb[0].mxu0
    %v365 = vadd.f32 %v296, %v364
    %v366 = vpop.f32.mrb[0].mxu0
    %367 = vdwg.mxu0
    %v368 = vtanh.pop %v365
    %369 = vst [vmem:[#allocation10] sm:$0xff] %v368
    // Predicated region
    $region46: #{tpu_custom_call.1} parent=1 // pred_check
      _
    $region47: #{tpu_custom_call.1} parent=1 // pred_check_branch
      %371 = sbr.rel (0) target = $region49
    $region48: #{tpu_custom_call.1} parent=1 // pred_region
      %s373 = ssub.s32 128, 128
      %374 = vsyncadd [#allocation4], %s373
      %s376 = sshll.u32 [#allocation10], 4
      %s377 = int_to_ptr.vmem [resolvable:$true] %s376
      %379 = dma.vmem_to_hbm [thread:$0]  %s377, 128, %s7, [#allocation4]
    $region49: #{tpu_custom_call.1} parent=1 // pred_fallthru
      _
    // Predicated region
    $region50: #{tpu_custom_call.1} parent=1 // pred_check
      _
    $region51: #{tpu_custom_call.1} parent=1 // pred_check_branch
      %381 = sbr.rel (0) target = $region53
    $region52: #{tpu_custom_call.1} parent=1 // pred_region
      %382 = dma.done [#allocation4], 128
    $region53: #{tpu_custom_call.1} parent=1 // pred_fallthru
      _
    %383 = vsyncpa [#allocation3], 1
    %384 = vsyncpa [#allocation6], 1
    %385 = vsyncpa [#allocation9], 1
    %386 = vsyncpa [#allocation4], 1

// kernel: tpu_custom_call.1
$region0: #{tpu_custom_call.1}
  #allocation0 [shape = 'u32[]', space=smem, size = 0x4, offset = 0x4, fixed_abs, tag = 'smem constant byte address 0x4 - core index']
  #allocation1 [shape = 'u32[144,128]{1,0:T(1,128)}', space=vmem, size = 0x12000, scoped, tag = 'internal scratch']
  %s0 = inlined_call_operand.hbm [shape: f32[8,128], index: 0, kind: input, shape index: {}]
  %s1 = inlined_call_operand.hbm [shape: f32[128,128], index: 1, kind: input, shape index: {}]
  %s2 = inlined_call_operand.vmem [shape: f32[1,128], index: 2, kind: input, shape index: {}]
  %s3 = inlined_call_operand.hbm [shape: f32[128,128], index: 3, kind: input, shape index: {}]
  %s4 = inlined_call_operand.vmem [shape: f32[1,128], index: 4, kind: input, shape index: {}]
  %s5 = inlined_call_operand.hbm [shape: f32[128,128], index: 5, kind: input, shape index: {}]
  %s6 = inlined_call_operand.vmem [shape: f32[1,128], index: 6, kind: input, shape index: {}]
  %s7 = inlined_call_operand.hbm [shape: f32[8,128], index: 7, kind: output, shape index: {}]
  %s8 = sld [smem:[#allocation0]]
  $region54: #{tpu_custom_call.1} parent=0
    _
  %s10 = ssub.s32 1, %s8
  %s11 = scalar_select 0, %s10, %s8
  $region1: #{tpu_custom_call.1} parent=0
    #allocation2 [shape = 'u8[4096]{0}', space=vmem, size = 0x1000, scoped, tag = 'input window, operand 0, single buffered']
    #allocation3 [shape = 's32[1]{0}', space=sflag, size = 0x4, scoped, tag = 'scoped memory for tpu_custom_call.1']
    #allocation4 [shape = 's32[1]{0}', space=sflag, size = 0x4, scoped, tag = 'scoped memory for tpu_custom_call.1']
    #allocation5 [shape = 'u8[65536]{0}', space=vmem, size = 0x10000, scoped, tag = 'input window, operand 1, single buffered']
    #allocation6 [shape = 's32[1]{0}', space=sflag, size = 0x4, scoped, tag = 'scoped memory for tpu_custom_call.1']
    #allocation7 [shape = 'u8[65536]{0}', space=vmem, size = 0x10000, scoped, tag = 'input window, operand 3, single buffered']
    #allocation8 [shape = 'u8[65536]{0}', space=vmem, size = 0x10000, scoped, tag = 'input window, operand 5, single buffered']
    #allocation9 [shape = 's32[1]{0}', space=sflag, size = 0x4, scoped, tag = 'scoped memory for tpu_custom_call.1']
    #allocation10 [shape = 'u8[4096]{0}', space=vmem, size = 0x1000, scoped, tag = 'output window, operand 0, single buffered']
    %12 = vsyncpa [#allocation3], 0
    %13 = vsyncpa [#allocation6], 0
    %14 = vsyncpa [#allocation9], 0
    %15 = vsyncpa [#allocation4], 0
    // Predicated region
    $region2: #{tpu_custom_call.1} parent=1 // pred_check
      _
    $region3: #{tpu_custom_call.1} parent=1 // pred_check_branch
      %17 = sbr.rel (0) target = $region5
    $region4: #{tpu_custom_call.1} parent=1 // pred_region
      %s19 = ssub.s32 128, 128
      %20 = vsyncadd [#allocation3], %s19
      %s22 = sshll.u32 [#allocation2], 4
      %s23 = int_to_ptr.vmem [resolvable:$true] %s22
      %25 = dma.hbm_to_vmem [thread:$0]  %s0, 128, %s23, [#allocation3]
    $region5: #{tpu_custom_call.1} parent=1 // pred_fallthru
      _
    // Predicated region
    $region6: #{tpu_custom_call.1} parent=1 // pred_check
      _
    $region7: #{tpu_custom_call.1} parent=1 // pred_check_branch
      %27 = sbr.rel (0) target = $region9
    $region8: #{tpu_custom_call.1} parent=1 // pred_region
      %s29 = ssub.s32 2048, 2048
      %30 = vsyncadd [#allocation6], %s29
      %s31 = sshll.u32 [#allocation5], 4
      %s32 = int_to_ptr.vmem [resolvable:$true] %s31
      %37 = dma.hbm_to_vmem [thread:$0]  %s1, 2048, %s32, [#allocation6], 128, 128, 8
    $region9: #{tpu_custom_call.1} parent=1 // pred_fallthru
      _
    // Predicated region
    $region10: #{tpu_custom_call.1} parent=1 // pred_check
      _
    $region11: #{tpu_custom_call.1} parent=1 // pred_check_branch
      %39 = sbr.rel (0) target = $region13
    $region12: #{tpu_custom_call.1} parent=1 // pred_region
      _
    $region13: #{tpu_custom_call.1} parent=1 // pred_fallthru
      _
    // Predicated region
    $region14: #{tpu_custom_call.1} parent=1 // pred_check
      _
    $region15: #{tpu_custom_call.1} parent=1 // pred_check_branch
      %41 = sbr.rel (0) target = $region17
    $region16: #{tpu_custom_call.1} parent=1 // pred_region
      %s43 = ssub.s32 2048, 2048
      %44 = vsyncadd [#allocation6], %s43
      %s45 = sshll.u32 [#allocation7], 4
      %s46 = int_to_ptr.vmem [resolvable:$true] %s45
      %51 = dma.hbm_to_vmem [thread:$0]  %s3, 2048, %s46, [#allocation6], 128, 128, 8
    $region17: #{tpu_custom_call.1} parent=1 // pred_fallthru
      _
    // Predicated region
    $region18: #{tpu_custom_call.1} parent=1 // pred_check
      _
    $region19: #{tpu_custom_call.1} parent=1 // pred_check_branch
      %53 = sbr.rel (0) target = $region21
    $region20: #{tpu_custom_call.1} parent=1 // pred_region
      _
    $region21: #{tpu_custom_call.1} parent=1 // pred_fallthru
      _
    // Predicated region
    $region22: #{tpu_custom_call.1} parent=1 // pred_check
      _
    $region23: #{tpu_custom_call.1} parent=1 // pred_check_branch
      %55 = sbr.rel (0) target = $region25
    $region24: #{tpu_custom_call.1} parent=1 // pred_region
      %s57 = ssub.s32 2048, 2048
      %58 = vsyncadd [#allocation9], %s57
      %s59 = sshll.u32 [#allocation8], 4
      %s60 = int_to_ptr.vmem [resolvable:$true] %s59
      %65 = dma.hbm_to_vmem [thread:$0]  %s5, 2048, %s60, [#allocation9], 128, 128, 8
    $region25: #{tpu_custom_call.1} parent=1 // pred_fallthru
      _
    // Predicated region
    $region26: #{tpu_custom_call.1} parent=1 // pred_check
      _
    $region27: #{tpu_custom_call.1} parent=1 // pred_check_branch
      %67 = sbr.rel (0) target = $region29
    $region28: #{tpu_custom_call.1} parent=1 // pred_region
      _
    $region29: #{tpu_custom_call.1} parent=1 // pred_fallthru
      _
    // Predicated region
    $region30: #{tpu_custom_call.1} parent=1 // pred_check
      _
    $region31: #{tpu_custom_call.1} parent=1 // pred_check_branch
      %69 = sbr.rel (0) target = $region33
    $region32: #{tpu_custom_call.1} parent=1 // pred_region
      %70 = dma.done [#allocation3], 128
    $region33: #{tpu_custom_call.1} parent=1 // pred_fallthru
      _
    // Predicated region
    $region34: #{tpu_custom_call.1} parent=1 // pred_check
      _
    $region35: #{tpu_custom_call.1} parent=1 // pred_check_branch
      %72 = sbr.rel (0) target = $region37
    $region36: #{tpu_custom_call.1} parent=1 // pred_region
      %73 = dma.done [#allocation6], 2048
    $region37: #{tpu_custom_call.1} parent=1 // pred_fallthru
      _
    // Predicated region
    $region38: #{tpu_custom_call.1} parent=1 // pred_check
      _
    $region39: #{tpu_custom_call.1} parent=1 // pred_check_branch
      %75 = sbr.rel (0) target = $region41
    $region40: #{tpu_custom_call.1} parent=1 // pred_region
      %76 = dma.done [#allocation6], 2048
    $region41: #{tpu_custom_call.1} parent=1 // pred_fallthru
      _
    // Predicated region
    $region42: #{tpu_custom_call.1} parent=1 // pred_check
      _
    $region43: #{tpu_custom_call.1} parent=1 // pred_check_branch
      %78 = sbr.rel (0) target = $region45
    $region44: #{tpu_custom_call.1} parent=1 // pred_region
      %79 = dma.done [#allocation9], 2048
    $region45: #{tpu_custom_call.1} parent=1 // pred_fallthru
      _
    %v80 = vld [vmem:[#allocation2] sm:$0xff]
    %v81 = vld [vmem:[#allocation5] sm:$0xff]
    %v82 = vld [vmem:[#allocation5 + $0x8] sm:$0xff]
    %v83 = vld [vmem:[#allocation5 + $0x10] sm:$0xff]
    %v84 = vld [vmem:[#allocation5 + $0x18] sm:$0xff]
    %v85 = vld [vmem:[#allocation5 + $0x20] sm:$0xff]
    %v86 = vld [vmem:[#allocation5 + $0x28] sm:$0xff]
    %v87 = vld [vmem:[#allocation5 + $0x30] sm:$0xff]
    %v88 = vld [vmem:[#allocation5 + $0x38] sm:$0xff]
    %v89 = vld [vmem:[#allocation5 + $0x40] sm:$0xff]
    %v90 = vld [vmem:[#allocation5 + $0x48] sm:$0xff]
    %v91 = vld [vmem:[#allocation5 + $0x50] sm:$0xff]
    %v92 = vld [vmem:[#allocation5 + $0x58] sm:$0xff]
    %v93 = vld [vmem:[#allocation5 + $0x60] sm:$0xff]
    %v94 = vld [vmem:[#allocation5 + $0x68] sm:$0xff]
    %v95 = vld [vmem:[#allocation5 + $0x70] sm:$0xff]
    %v96 = vld [vmem:[#allocation5 + $0x78] sm:$0xff]
    %v97 = vld [vmem:[%s2] sm:$0x1]
    %v99 = vlaneseq
    %v100 = vshrl.u32 %v99, 7
    %v101 = vsub.s32 0, %v100
    %v102 = vrot.slane %v97, %v101
    %104 = vmatprep.subr.mxu0 0.0
    %105 = vmatpush1.msra.mxu0 %v81
    %106 = vmatprep.subr.mxu0 0.0
    %107 = vmatpush1.msra.mxu0 %v82
    %108 = vmatprep.subr.mxu0 0.0
    %109 = vmatpush1.msra.mxu0 %v83
    %110 = vmatprep.subr.mxu0 0.0
    %111 = vmatpush1.msra.mxu0 %v84
    %112 = vmatprep.subr.mxu0 0.0
    %113 = vmatpush1.msra.mxu0 %v85
    %114 = vmatprep.subr.mxu0 0.0
    %115 = vmatpush1.msra.mxu0 %v86
    %116 = vmatprep.subr.mxu0 0.0
    %117 = vmatpush1.msra.mxu0 %v87
    %118 = vmatprep.subr.mxu0 0.0
    %119 = vmatpush1.msra.mxu0 %v88
    %120 = vmatprep.subr.mxu0 0.0
    %121 = vmatpush1.msra.mxu0 %v89
    %122 = vmatprep.subr.mxu0 0.0
    %123 = vmatpush1.msra.mxu0 %v90
    %124 = vmatprep.subr.mxu0 0.0
    %125 = vmatpush1.msra.mxu0 %v91
    %126 = vmatprep.subr.mxu0 0.0
    %127 = vmatpush1.msra.mxu0 %v92
    %128 = vmatprep.subr.mxu0 0.0
    %129 = vmatpush1.msra.mxu0 %v93
    %130 = vmatprep.subr.mxu0 0.0
    %131 = vmatpush1.msra.mxu0 %v94
    %132 = vmatprep.subr.mxu0 0.0
    %133 = vmatpush1.msra.mxu0 %v95
    %134 = vmatprep.subr.mxu0 0.0
    %135 = vmatpush1.msra.mxu0 %v96
    %136 = vmatprep.subr.mxu0 0.0
    %137 = vmatpush1.msra.mxu0 0.0
    %138 = vmatprep.subr.mxu0 0.0
    %139 = vmatpush1.msra.mxu0 0.0
    %140 = vmatprep.subr.mxu0 0.0
    %141 = vmatpush1.msra.mxu0 0.0
    %142 = vmatprep.subr.mxu0 0.0
    %143 = vmatpush1.msra.mxu0 0.0
    %144 = vmatprep.subr.mxu0 0.0
    %145 = vmatpush1.msra.mxu0 0.0
    %146 = vmatprep.subr.mxu0 0.0
    %147 = vmatpush1.msra.mxu0 0.0
    %148 = vmatprep.subr.mxu0 0.0
    %149 = vmatpush1.msra.mxu0 0.0
    %150 = vmatprep.subr.mxu0 0.0
    %151 = vmatpush1.msra.mxu0 0.0
    %152 = vmatprep.subr.mxu0 0.0
    %153 = vmatpush1.msra.mxu0 0.0
    %154 = vmatprep.subr.mxu0 0.0
    %155 = vmatpush1.msra.mxu0 0.0
    %156 = vmatprep.subr.mxu0 0.0
    %157 = vmatpush1.msra.mxu0 0.0
    %158 = vmatprep.subr.mxu0 0.0
    %159 = vmatpush1.msra.mxu0 0.0
    %160 = vmatprep.subr.mxu0 0.0
    %161 = vmatpush1.msra.mxu0 0.0
    %162 = vmatprep.subr.mxu0 0.0
    %163 = vmatpush1.msra.mxu0 0.0
    %164 = vmatprep.subr.mxu0 0.0
    %165 = vmatpush1.msra.mxu0 0.0
    %166 = vmatprep.subr.mxu0 0.0
    %167 = vmatpush1.msra.mxu0 0.0
    %168 = vmatprep.mubr.f32.mxu0 0.0
    %169 = vmatmul.mubr.f32.gmra.mrb[0].mxu0 %v80
    %v170 = vpop.f32.mrb[0].mxu0
    %v171 = vadd.f32 %v102, %v170
    %v172 = vpop.f32.mrb[0].mxu0
    %173 = vdwg.mxu0
    %v174 = vmul.f32 %v171, 0.5
    %v175 = vtanh.pop %v174
    %v176 = vmul.f32 %v175, 0.5
    %v177 = vadd.f32 %v176, 0.5
    %v178 = vld [vmem:[#allocation7] sm:$0xff]
    %v179 = vld [vmem:[#allocation7 + $0x8] sm:$0xff]
    %v180 = vld [vmem:[#allocation7 + $0x10] sm:$0xff]
    %v181 = vld [vmem:[#allocation7 + $0x18] sm:$0xff]
    %v182 = vld [vmem:[#allocation7 + $0x20] sm:$0xff]
    %v183 = vld [vmem:[#allocation7 + $0x28] sm:$0xff]
    %v184 = vld [vmem:[#allocation7 + $0x30] sm:$0xff]
    %v185 = vld [vmem:[#allocation7 + $0x38] sm:$0xff]
    %v186 = vld [vmem:[#allocation7 + $0x40] sm:$0xff]
    %v187 = vld [vmem:[#allocation7 + $0x48] sm:$0xff]
    %v188 = vld [vmem:[#allocation7 + $0x50] sm:$0xff]
    %v189 = vld [vmem:[#allocation7 + $0x58] sm:$0xff]
    %v190 = vld [vmem:[#allocation7 + $0x60] sm:$0xff]
    %v191 = vld [vmem:[#allocation7 + $0x68] sm:$0xff]
    %v192 = vld [vmem:[#allocation7 + $0x70] sm:$0xff]
    %v193 = vld [vmem:[#allocation7 + $0x78] sm:$0xff]
    %v194 = vld [vmem:[%s4] sm:$0x1]
    %v196 = vlaneseq
    %v197 = vshrl.u32 %v196, 7
    %v198 = vsub.s32 0, %v197
    %v199 = vrot.slane %v194, %v198
    %201 = vmatprep.subr.mxu0 0.0
    %202 = vmatpush1.msra.mxu0 %v178
    %203 = vmatprep.subr.mxu0 0.0
    %204 = vmatpush1.msra.mxu0 %v179
    %205 = vmatprep.subr.mxu0 0.0
    %206 = vmatpush1.msra.mxu0 %v180
    %207 = vmatprep.subr.mxu0 0.0
    %208 = vmatpush1.msra.mxu0 %v181
    %209 = vmatprep.subr.mxu0 0.0
    %210 = vmatpush1.msra.mxu0 %v182
    %211 = vmatprep.subr.mxu0 0.0
    %212 = vmatpush1.msra.mxu0 %v183
    %213 = vmatprep.subr.mxu0 0.0
    %214 = vmatpush1.msra.mxu0 %v184
    %215 = vmatprep.subr.mxu0 0.0
    %216 = vmatpush1.msra.mxu0 %v185
    %217 = vmatprep.subr.mxu0 0.0
    %218 = vmatpush1.msra.mxu0 %v186
    %219 = vmatprep.subr.mxu0 0.0
    %220 = vmatpush1.msra.mxu0 %v187
    %221 = vmatprep.subr.mxu0 0.0
    %222 = vmatpush1.msra.mxu0 %v188
    %223 = vmatprep.subr.mxu0 0.0
    %224 = vmatpush1.msra.mxu0 %v189
    %225 = vmatprep.subr.mxu0 0.0
    %226 = vmatpush1.msra.mxu0 %v190
    %227 = vmatprep.subr.mxu0 0.0
    %228 = vmatpush1.msra.mxu0 %v191
    %229 = vmatprep.subr.mxu0 0.0
    %230 = vmatpush1.msra.mxu0 %v192
    %231 = vmatprep.subr.mxu0 0.0
    %232 = vmatpush1.msra.mxu0 %v193
    %233 = vmatprep.subr.mxu0 0.0
    %234 = vmatpush1.msra.mxu0 0.0
    %235 = vmatprep.subr.mxu0 0.0
    %236 = vmatpush1.msra.mxu0 0.0
    %237 = vmatprep.subr.mxu0 0.0
    %238 = vmatpush1.msra.mxu0 0.0
    %239 = vmatprep.subr.mxu0 0.0
    %240 = vmatpush1.msra.mxu0 0.0
    %241 = vmatprep.subr.mxu0 0.0
    %242 = vmatpush1.msra.mxu0 0.0
    %243 = vmatprep.subr.mxu0 0.0
    %244 = vmatpush1.msra.mxu0 0.0
    %245 = vmatprep.subr.mxu0 0.0
    %246 = vmatpush1.msra.mxu0 0.0
    %247 = vmatprep.subr.mxu0 0.0
    %248 = vmatpush1.msra.mxu0 0.0
    %249 = vmatprep.subr.mxu0 0.0
    %250 = vmatpush1.msra.mxu0 0.0
    %251 = vmatprep.subr.mxu0 0.0
    %252 = vmatpush1.msra.mxu0 0.0
    %253 = vmatprep.subr.mxu0 0.0
    %254 = vmatpush1.msra.mxu0 0.0
    %255 = vmatprep.subr.mxu0 0.0
    %256 = vmatpush1.msra.mxu0 0.0
    %257 = vmatprep.subr.mxu0 0.0
    %258 = vmatpush1.msra.mxu0 0.0
    %259 = vmatprep.subr.mxu0 0.0
    %260 = vmatpush1.msra.mxu0 0.0
    %261 = vmatprep.subr.mxu0 0.0
    %262 = vmatpush1.msra.mxu0 0.0
    %263 = vmatprep.subr.mxu0 0.0
    %264 = vmatpush1.msra.mxu0 0.0
    %265 = vmatprep.mubr.f32.mxu0 0.0
    %266 = vmatmul.mubr.f32.gmra.mrb[0].mxu0 %v177
    %v267 = vpop.f32.mrb[0].mxu0
    %v268 = vadd.f32 %v199, %v267
    %v269 = vpop.f32.mrb[0].mxu0
    %270 = vdwg.mxu0
    %v271 = vmul.f32 %v268, 0.5
    %v272 = vtanh.pop %v271
    %v273 = vmul.f32 %v272, 0.5
    %v274 = vadd.f32 %v273, 0.5
    %v275 = vld [vmem:[#allocation8] sm:$0xff]
    %v276 = vld [vmem:[#allocation8 + $0x8] sm:$0xff]
    %v277 = vld [vmem:[#allocation8 + $0x10] sm:$0xff]
    %v278 = vld [vmem:[#allocation8 + $0x18] sm:$0xff]
    %v279 = vld [vmem:[#allocation8 + $0x20] sm:$0xff]
    %v280 = vld [vmem:[#allocation8 + $0x28] sm:$0xff]
    %v281 = vld [vmem:[#allocation8 + $0x30] sm:$0xff]
    %v282 = vld [vmem:[#allocation8 + $0x38] sm:$0xff]
    %v283 = vld [vmem:[#allocation8 + $0x40] sm:$0xff]
    %v284 = vld [vmem:[#allocation8 + $0x48] sm:$0xff]
    %v285 = vld [vmem:[#allocation8 + $0x50] sm:$0xff]
    %v286 = vld [vmem:[#allocation8 + $0x58] sm:$0xff]
    %v287 = vld [vmem:[#allocation8 + $0x60] sm:$0xff]
    %v288 = vld [vmem:[#allocation8 + $0x68] sm:$0xff]
    %v289 = vld [vmem:[#allocation8 + $0x70] sm:$0xff]
    %v290 = vld [vmem:[#allocation8 + $0x78] sm:$0xff]
    %v291 = vld [vmem:[%s6] sm:$0x1]
    %v293 = vlaneseq
    %v294 = vshrl.u32 %v293, 7
    %v295 = vsub.s32 0, %v294
    %v296 = vrot.slane %v291, %v295
    %298 = vmatprep.subr.mxu0 0.0
    %299 = vmatpush1.msra.mxu0 %v275
    %300 = vmatprep.subr.mxu0 0.0
    %301 = vmatpush1.msra.mxu0 %v276
    %302 = vmatprep.subr.mxu0 0.0
    %303 = vmatpush1.msra.mxu0 %v277
    %304 = vmatprep.subr.mxu0 0.0
    %305 = vmatpush1.msra.mxu0 %v278
    %306 = vmatprep.subr.mxu0 0.0
    %307 = vmatpush1.msra.mxu0 %v279
    %308 = vmatprep.subr.mxu0 0.0
    %309 = vmatpush1.msra.mxu0 %v280
    %310 = vmatprep.subr.mxu0 0.0
    %311 = vmatpush1.msra.mxu0 %v281
    %312 = vmatprep.subr.mxu0 0.0
    %313 = vmatpush1.msra.mxu0 %v282
    %314 = vmatprep.subr.mxu0 0.0
    %315 = vmatpush1.msra.mxu0 %v283
    %316 = vmatprep.subr.mxu0 0.0
    %317 = vmatpush1.msra.mxu0 %v284
    %318 = vmatprep.subr.mxu0 0.0
    %319 = vmatpush1.msra.mxu0 %v285
    %320 = vmatprep.subr.mxu0 0.0
    %321 = vmatpush1.msra.mxu0 %v286
    %322 = vmatprep.subr.mxu0 0.0
    %323 = vmatpush1.msra.mxu0 %v287
    %324 = vmatprep.subr.mxu0 0.0
    %325 = vmatpush1.msra.mxu0 %v288
    %326 = vmatprep.subr.mxu0 0.0
    %327 = vmatpush1.msra.mxu0 %v289
    %328 = vmatprep.subr.mxu0 0.0
    %329 = vmatpush1.msra.mxu0 %v290
    %330 = vmatprep.subr.mxu0 0.0
    %331 = vmatpush1.msra.mxu0 0.0
    %332 = vmatprep.subr.mxu0 0.0
    %333 = vmatpush1.msra.mxu0 0.0
    %334 = vmatprep.subr.mxu0 0.0
    %335 = vmatpush1.msra.mxu0 0.0
    %336 = vmatprep.subr.mxu0 0.0
    %337 = vmatpush1.msra.mxu0 0.0
    %338 = vmatprep.subr.mxu0 0.0
    %339 = vmatpush1.msra.mxu0 0.0
    %340 = vmatprep.subr.mxu0 0.0
    %341 = vmatpush1.msra.mxu0 0.0
    %342 = vmatprep.subr.mxu0 0.0
    %343 = vmatpush1.msra.mxu0 0.0
    %344 = vmatprep.subr.mxu0 0.0
    %345 = vmatpush1.msra.mxu0 0.0
    %346 = vmatprep.subr.mxu0 0.0
    %347 = vmatpush1.msra.mxu0 0.0
    %348 = vmatprep.subr.mxu0 0.0
    %349 = vmatpush1.msra.mxu0 0.0
    %350 = vmatprep.subr.mxu0 0.0
    %351 = vmatpush1.msra.mxu0 0.0
    %352 = vmatprep.subr.mxu0 0.0
    %353 = vmatpush1.msra.mxu0 0.0
    %354 = vmatprep.subr.mxu0 0.0
    %355 = vmatpush1.msra.mxu0 0.0
    %356 = vmatprep.subr.mxu0 0.0
    %357 = vmatpush1.msra.mxu0 0.0
    %358 = vmatprep.subr.mxu0 0.0
    %359 = vmatpush1.msra.mxu0 0.0
    %360 = vmatprep.subr.mxu0 0.0
    %361 = vmatpush1.msra.mxu0 0.0
    %362 = vmatprep.mubr.f32.mxu0 0.0
    %363 = vmatmul.mubr.f32.gmra.mrb[0].mxu0 %v274
    %v364 = vpop.f32.mrb[0].mxu0
    %v365 = vadd.f32 %v296, %v364
    %v366 = vpop.f32.mrb[0].mxu0
    %367 = vdwg.mxu0
    %v368 = vtanh.pop %v365
    %369 = vst [vmem:[#allocation10] sm:$0xff] %v368
    // Predicated region
    $region46: #{tpu_custom_call.1} parent=1 // pred_check
      _
    $region47: #{tpu_custom_call.1} parent=1 // pred_check_branch
      %371 = sbr.rel (0) target = $region49
    $region48: #{tpu_custom_call.1} parent=1 // pred_region
      %s373 = ssub.s32 128, 128
      %374 = vsyncadd [#allocation4], %s373
      %s376 = sshll.u32 [#allocation10], 4
      %s377 = int_to_ptr.vmem [resolvable:$true] %s376
      %379 = dma.vmem_to_hbm [thread:$0]  %s377, 128, %s7, [#allocation4]
    $region49: #{tpu_custom_call.1} parent=1 // pred_fallthru
      _
    // Predicated region
    $region50: #{tpu_custom_call.1} parent=1 // pred_check
      _
    $region51: #{tpu_custom_call.1} parent=1 // pred_check_branch
      %381 = sbr.rel (0) target = $region53
    $region52: #{tpu_custom_call.1} parent=1 // pred_region
      %382 = dma.done [#allocation4], 128
    $region53: #{tpu_custom_call.1} parent=1 // pred_fallthru
      _
    %383 = vsyncpa [#allocation3], 1
    %384 = vsyncpa [#allocation6], 1
    %385 = vsyncpa [#allocation9], 1
    %386 = vsyncpa [#allocation4], 1

</llo_original>
